<compile_context>
chip_gen: v6e
topology: v6e:2x2x1
jax: 0.10.0
libtpu: 0.0.40
codegen_flags: <defaults>
</compile_context>

<pallas_src>
import functools

import jax
import jax.numpy as jnp
from jax.experimental import pallas as pl
from jax.experimental.pallas import tpu as pltpu


def _round_up(x, m):
    return -(-x // m) * m


# ----------------------------------------------------------------------------
# Fused decoder kernel: all decode layers + sigmoid head, one row tile per step.
# ----------------------------------------------------------------------------
def _decoder_kernel(nlayers, pair_ref, *refs):
    # refs = (w_0, b_0, ..., w_{L-1}, b_{L-1}, out_w_row, out_b, o_ref)
    x = pair_ref[...]                                      # (T, 2F) bf16
    idx = 0
    for _ in range(nlayers):
        w_ref, b_ref = refs[idx], refs[idx + 1]
        idx += 2
        h = jnp.dot(x.astype(w_ref.dtype), w_ref[...],     # MXU, f32 accumulation
                    preferred_element_type=jnp.float32)
        x = jnp.maximum(h + b_ref[...], 0.0)               # folded-BN bias + ReLU (f32)

    out_w_ref, out_b_ref, o_ref = refs[idx], refs[idx + 1], refs[idx + 2]
    # (1,H) @ (T,H)^T -> (1,T): logits come out lane-dense, so the output store is a
    # handful of dense vregs rather than T/8 masked single-lane stores.
    logit = jax.lax.dot_general(
        out_w_ref[...], x,
        dimension_numbers=(((1,), (1,)), ((), ())),
        preferred_element_type=jnp.float32,
    ) + out_b_ref[...]
    o_ref[...] = jax.nn.sigmoid(logit).astype(o_ref.dtype)


# ----------------------------------------------------------------------------
# Wrapper: one pallas_call over row tiles, weights resident in VMEM.
# ----------------------------------------------------------------------------
def fused_decoder(pair, ws, bs, out_w_row, out_b, *, tile_rows=None):
    P, two_f = pair.shape
    nlayers = len(ws)

    if tile_rows is None:
        if P <= 512:
            tile_rows = P            # single (possibly ragged) full block
        else:
            # Large tiles amortize the ~0.35us/step grid overhead; a multiple of 128
            # keeps the lane-dense (1, tile_rows) output block legal and bf16 rows
            # packed.  Cap at 2048 and keep >= 2 steps so the "parallel" axis can be
            # sharded across v7x's two TensorCores.  (Sweep 1024-4096 for huge P.)
            tile_rows = min(2048, _round_up(pl.cdiv(P, 2), 128))
    grid = (pl.cdiv(P, tile_rows),)

    # VMEM footprint: double-buffered bf16 input stream + single-buffered weights +
    # f32 activation temporaries + output blocks, with headroom.  Clamped to stay
    # within v7x's 64 MiB physical VMEM.
    max_width = max([int(two_f)] + [int(w.shape[1]) for w in ws])
    footprint = (
        2 * tile_rows * two_f * pair.dtype.itemsize
        + sum(int(w.size) * w.dtype.itemsize for w in ws)
        + sum(int(b.size) * 4 for b in bs)
        + int(out_w_row.size) * 4 + 4
        + 4 * tile_rows * max_width * 4
        + 2 * tile_rows * 4
    )
    vmem_limit = int(min(64 << 20, max(8 << 20, 2 * footprint)))

    def run(resident_kwargs):
        inputs = [pair]
        in_specs = [pl.BlockSpec((tile_rows, two_f), lambda i: (i, 0))]
        for w, b in zip(ws, bs):
            inputs += [w, b.reshape(1, -1)]
            in_specs += [
                pl.BlockSpec(w.shape, lambda i: (0, 0), **resident_kwargs),
                pl.BlockSpec((1, int(b.shape[0])), lambda i: (0, 0), **resident_kwargs),
            ]
        inputs += [out_w_row, out_b.reshape(1, 1)]
        in_specs += [
            pl.BlockSpec(out_w_row.shape, lambda i: (0, 0), **resident_kwargs),
            pl.BlockSpec((1, 1), lambda i: (0, 0), **resident_kwargs),
        ]
        return pl.pallas_call(
            functools.partial(_decoder_kernel, nlayers),
            out_shape=jax.ShapeDtypeStruct((1, P), jnp.float32),
            grid_spec=pltpu.PrefetchScalarGridSpec(
                num_scalar_prefetch=0,
                grid=grid,
                in_specs=in_specs,
                out_specs=pl.BlockSpec((1, tile_rows), lambda i: (0, i)),
            ),
            compiler_params=pltpu.CompilerParams(
                dimension_semantics=("parallel",),
                vmem_limit_bytes=vmem_limit,
            ),
        )(*inputs)

    try:
        # Constant-index weight/bias blocks never change across the grid: single-buffer
        # them so the VMEM saved can fund a larger row tile (matters on v7x's 64 MiB).
        out = run({"pipeline_mode": pl.Buffered(1)})
    except Exception:  # fallback for jax versions without pipeline_mode support
        out = run({})

    return out.reshape(P, 1)


# ----------------------------------------------------------------------------
# CDA_Decoder forward (inference)
# ----------------------------------------------------------------------------
def cda_decoder_forward(params, nodes_features, circRNA_index, drug_index):
    eps = 1e-5
    decode = params["decode"]
    nlayers = len(decode)

    # Fold eval-mode BN of layer l into layer (l+1)'s weights/bias, and the last
    # decode layer's BN into the final linear head (mathematically exact at eval):
    #   BN_l(r) @ W = r @ (diag(scale_l) W) + (shift_l @ W)
    ws = [decode[0]["w"]]
    bs = [decode[0]["b"]]
    for l in range(1, nlayers):
        prev = decode[l - 1]
        scale = prev["bn_gamma"] / jnp.sqrt(prev["bn_var"] + eps)
        shift = prev["bn_beta"] - prev["bn_mean"] * scale
        w, b = decode[l]["w"], decode[l]["b"]
        ws.append(scale[:, None] * w)
        bs.append(shift @ w + b)

    last = decode[-1]
    scale = last["bn_gamma"] / jnp.sqrt(last["bn_var"] + eps)
    shift = last["bn_beta"] - last["bn_mean"] * scale
    out_w, out_b = params["out_w"], params["out_b"]            # (H, 1), (1,)
    out_w_row = (scale[:, None] * out_w)[:, 0].reshape(1, -1)  # (1, H) f32
    out_b_f = (shift @ out_w + out_b).reshape(1)               # (1,)

    # bf16 streaming: cast the node table once, gather + concat into a single
    # [P, 2F] bf16 stream (half the HBM bytes, one DMA stream per grid step).
    # TODO(synk): for P >> num_nodes an in-kernel gather from a VMEM-resident node
    # table (indices via scalar prefetch) would cut HBM traffic ~3x further.
    nodes_bf16 = nodes_features.astype(jnp.bfloat16)
    pair = jnp.concatenate(
        [nodes_bf16[circRNA_index], nodes_bf16[drug_index]], axis=1)   # [P, 2F] bf16

    ws_bf16 = [w.astype(jnp.bfloat16) for w in ws]
    bs_f32 = [b.astype(jnp.float32) for b in bs]

    # Dropout layers are identity at inference.
    return fused_decoder(pair, ws_bf16, bs_f32, out_w_row, out_b_f)


# ----------------------------------------------------------------------------
# Params / reference
# ----------------------------------------------------------------------------
def init_params(key, nodefeat_size, nhidden):
    params = {"decode": []}
    in_dim = nodefeat_size
    for h in nhidden:
        key, kw, kb, kg, kbt, km, kv = jax.random.split(key, 7)
        params["decode"].append(
            dict(
                w=jax.random.normal(kw, (in_dim, h), jnp.float32) * 0.1,
                b=jax.random.normal(kb, (h,), jnp.float32) * 0.1,
                bn_gamma=1.0 + 0.1 * jax.random.normal(kg, (h,), jnp.float32),
                bn_beta=0.1 * jax.random.normal(kbt, (h,), jnp.float32),
                bn_mean=0.1 * jax.random.normal(km, (h,), jnp.float32),
                bn_var=1.0 + 0.1 * jnp.abs(jax.random.normal(kv, (h,), jnp.float32)),
            )
        )
        in_dim = h
    key, kw, kb = jax.random.split(key, 3)
    params["out_w"] = jax.random.normal(kw, (in_dim, 1), jnp.float32) * 0.1
    params["out_b"] = jax.random.normal(kb, (1,), jnp.float32) * 0.1
    return params


def _reference(params, nodes_features, circRNA_index, drug_index):
    eps = 1e-5
    x = jnp.concatenate(
        [nodes_features[circRNA_index], nodes_features[drug_index]], axis=1)
    for layer in params["decode"]:
        x = jnp.maximum(x @ layer["w"] + layer["b"], 0.0)
        x = (x - layer["bn_mean"]) / jnp.sqrt(layer["bn_var"] + eps)
        x = x * layer["bn_gamma"] + layer["bn_beta"]
    return jax.nn.sigmoid(x @ params["out_w"] + params["out_b"])


if __name__ == "__main__":
    key = jax.random.PRNGKey(0)

    # Small shapes: 10 nodes with 16-dim features -> Nodefeat_size = 32 (concat of 2).
    num_nodes, feat = 10, 16
    nodefeat_size = 2 * feat
    nhidden = [32, 32]

    key, knodes, kparams = jax.random.split(key, 3)
    nodes_features = jax.random.normal(knodes, (num_nodes, feat), jnp.float32)
    params = init_params(kparams, nodefeat_size, nhidden)

    # Case 1: tiny pair count (single ragged block).
    # Case 2: enough pairs to exercise the tiled path with a partial tail block
    #         (tile_rows=384, grid of 2, last block clipped on store).
    for num_pairs in (12, 600):
        key, kci, kdi = jax.random.split(key, 3)
        circRNA_index = jax.random.randint(kci, (num_pairs,), 0, num_nodes)
        drug_index = jax.random.randint(kdi, (num_pairs,), 0, num_nodes)

        out = cda_decoder_forward(params, nodes_features, circRNA_index, drug_index)
        out = jax.block_until_ready(out)

        ref = _reference(params, nodes_features, circRNA_index, drug_index)
        assert out.shape == (num_pairs, 1)
        # bf16-streamed activations: tolerances loosened accordingly.
        assert jnp.allclose(out, ref, atol=2e-2, rtol=2e-2), float(
            jnp.max(jnp.abs(out - ref)))

    print("KERNEL_OK")
</pallas_src>

<mosaic_0001>
module attributes {stable_mosaic.version = 11 : i64} {
  func.func @_decoder_kernel(%arg0: i32, %arg1: memref<12x32xbf16, #tpu.memory_space<vmem>>, %arg2: memref<32x32xbf16, #tpu.memory_space<vmem>>, %arg3: memref<1x32xf32, #tpu.memory_space<vmem>>, %arg4: memref<32x32xbf16, #tpu.memory_space<vmem>>, %arg5: memref<1x32xf32, #tpu.memory_space<vmem>>, %arg6: memref<1x32xf32, #tpu.memory_space<vmem>>, %arg7: memref<1x1xf32, #tpu.memory_space<vmem>>, %arg8: memref<1x12xf32, #tpu.memory_space<vmem>>) attributes {dimension_semantics = [#tpu.dimension_semantics<parallel>], iteration_bounds = array<i64: 1>, scalar_prefetch = 0 : i64, scratch_operands = 0 : i64, tpu.core_type = #tpu.core_type<tc>, window_params = [{transform_indices = @transform_0, window_bounds = array<i64: 12, 32>}, {pipeline_mode = #tpu.pipeline_mode<synchronous>, transform_indices = @transform_1, window_bounds = array<i64: 32, 32>}, {pipeline_mode = #tpu.pipeline_mode<synchronous>, transform_indices = @transform_2, window_bounds = array<i64: 1, 32>}, {pipeline_mode = #tpu.pipeline_mode<synchronous>, transform_indices = @transform_3, window_bounds = array<i64: 32, 32>}, {pipeline_mode = #tpu.pipeline_mode<synchronous>, transform_indices = @transform_4, window_bounds = array<i64: 1, 32>}, {pipeline_mode = #tpu.pipeline_mode<synchronous>, transform_indices = @transform_5, window_bounds = array<i64: 1, 32>}, {pipeline_mode = #tpu.pipeline_mode<synchronous>, transform_indices = @transform_6, window_bounds = array<i64: 1, 1>}, {transform_indices = @transform_7, window_bounds = array<i64: 1, 12>}]} {
    %c0 = arith.constant 0 : index
    %c0_0 = arith.constant 0 : index
    %0 = vector.load %arg1[%c0, %c0_0] : memref<12x32xbf16, #tpu.memory_space<vmem>>, vector<12x32xbf16>
    %c0_1 = arith.constant 0 : index
    %c0_2 = arith.constant 0 : index
    %1 = vector.load %arg2[%c0_1, %c0_2] : memref<32x32xbf16, #tpu.memory_space<vmem>>, vector<32x32xbf16>
    %cst = arith.constant dense<0.000000e+00> : vector<12x32xf32>
    %2 = tpu.matmul %0, %1, %cst {dimension_numbers = #tpu.dot_dimension_numbers<[1], [0], [0], [1], [0, 0, 1, 1], [], []>} : vector<12x32xbf16>, vector<32x32xbf16>, vector<12x32xf32> -> vector<12x32xf32>
    %c0_3 = arith.constant 0 : index
    %c0_4 = arith.constant 0 : index
    %3 = vector.load %arg3[%c0_3, %c0_4] : memref<1x32xf32, #tpu.memory_space<vmem>>, vector<1x32xf32>
    %4 = vector.broadcast %3 : vector<1x32xf32> to vector<12x32xf32>
    %5 = arith.addf %2, %4 : vector<12x32xf32>
    %cst_5 = arith.constant 0.000000e+00 : f32
    %6 = vector.broadcast %cst_5 : f32 to vector<12x32xf32>
    %7 = arith.maximumf %5, %6 : vector<12x32xf32>
    %8 = arith.truncf %7 : vector<12x32xf32> to vector<12x32xbf16>
    %c0_6 = arith.constant 0 : index
    %c0_7 = arith.constant 0 : index
    %9 = vector.load %arg4[%c0_6, %c0_7] : memref<32x32xbf16, #tpu.memory_space<vmem>>, vector<32x32xbf16>
    %cst_8 = arith.constant dense<0.000000e+00> : vector<12x32xf32>
    %10 = tpu.matmul %8, %9, %cst_8 {dimension_numbers = #tpu.dot_dimension_numbers<[1], [0], [0], [1], [0, 0, 1, 1], [], []>} : vector<12x32xbf16>, vector<32x32xbf16>, vector<12x32xf32> -> vector<12x32xf32>
    %c0_9 = arith.constant 0 : index
    %c0_10 = arith.constant 0 : index
    %11 = vector.load %arg5[%c0_9, %c0_10] : memref<1x32xf32, #tpu.memory_space<vmem>>, vector<1x32xf32>
    %12 = vector.broadcast %11 : vector<1x32xf32> to vector<12x32xf32>
    %13 = arith.addf %10, %12 : vector<12x32xf32>
    %cst_11 = arith.constant 0.000000e+00 : f32
    %14 = vector.broadcast %cst_11 : f32 to vector<12x32xf32>
    %15 = arith.maximumf %13, %14 : vector<12x32xf32>
    %c0_12 = arith.constant 0 : index
    %c0_13 = arith.constant 0 : index
    %16 = vector.load %arg6[%c0_12, %c0_13] : memref<1x32xf32, #tpu.memory_space<vmem>>, vector<1x32xf32>
    %cst_14 = arith.constant dense<0.000000e+00> : vector<1x12xf32>
    %17 = tpu.matmul %16, %15, %cst_14 {dimension_numbers = #tpu.dot_dimension_numbers<[1], [1], [0], [0], [0, 0, 1, 0], [], []>} : vector<1x32xf32>, vector<12x32xf32>, vector<1x12xf32> -> vector<1x12xf32>
    %c0_15 = arith.constant 0 : index
    %c0_16 = arith.constant 0 : index
    %18 = vector.load %arg7[%c0_15, %c0_16] : memref<1x1xf32, #tpu.memory_space<vmem>>, vector<1x1xf32>
    %19 = vector.broadcast %18 : vector<1x1xf32> to vector<1x12xf32>
    %20 = arith.addf %17, %19 : vector<1x12xf32>
    %21 = arith.negf %20 : vector<1x12xf32>
    %22 = math.exp %21 : vector<1x12xf32>
    %cst_17 = arith.constant 1.000000e+00 : f32
    %23 = vector.broadcast %cst_17 : f32 to vector<1x12xf32>
    %24 = arith.addf %23, %22 : vector<1x12xf32>
    %25 = arith.divf %23, %24 : vector<1x12xf32>
    %c0_18 = arith.constant 0 : index
    %c0_19 = arith.constant 0 : index
    %26 = vector.load %arg8[%c0_18, %c0_19] : memref<1x12xf32, #tpu.memory_space<vmem>>, vector<1x12xf32>
    tpu.vector_store %arg8[%c0_18, %c0_19], %25 {strides = array<i32>} : memref<1x12xf32, #tpu.memory_space<vmem>>, vector<1x12xf32>,
    return
  }
  func.func @transform_0(%arg0: i32) -> (i32, i32) {
    %c0_i32 = arith.constant 0 : i32
    %c0_i32_0 = arith.constant 0 : i32
    return %arg0, %c0_i32 : i32, i32
  }
  func.func @transform_1(%arg0: i32) -> (i32, i32) {
    %c0_i32 = arith.constant 0 : i32
    %c0_i32_0 = arith.constant 0 : i32
    %c0_i32_1 = arith.constant 0 : i32
    return %c0_i32, %c0_i32_0 : i32, i32
  }
  func.func @transform_2(%arg0: i32) -> (i32, i32) {
    %c0_i32 = arith.constant 0 : i32
    %c0_i32_0 = arith.constant 0 : i32
    %c0_i32_1 = arith.constant 0 : i32
    return %c0_i32, %c0_i32_0 : i32, i32
  }
  func.func @transform_3(%arg0: i32) -> (i32, i32) {
    %c0_i32 = arith.constant 0 : i32
    %c0_i32_0 = arith.constant 0 : i32
    %c0_i32_1 = arith.constant 0 : i32
    return %c0_i32, %c0_i32_0 : i32, i32
  }
  func.func @transform_4(%arg0: i32) -> (i32, i32) {
    %c0_i32 = arith.constant 0 : i32
    %c0_i32_0 = arith.constant 0 : i32
    %c0_i32_1 = arith.constant 0 : i32
    return %c0_i32, %c0_i32_0 : i32, i32
  }
  func.func @transform_5(%arg0: i32) -> (i32, i32) {
    %c0_i32 = arith.constant 0 : i32
    %c0_i32_0 = arith.constant 0 : i32
    %c0_i32_1 = arith.constant 0 : i32
    return %c0_i32, %c0_i32_0 : i32, i32
  }
  func.func @transform_6(%arg0: i32) -> (i32, i32) {
    %c0_i32 = arith.constant 0 : i32
    %c0_i32_0 = arith.constant 0 : i32
    %c0_i32_1 = arith.constant 0 : i32
    return %c0_i32, %c0_i32_0 : i32, i32
  }
  func.func @transform_7(%arg0: i32) -> (i32, i32) {
    %c0_i32 = arith.constant 0 : i32
    %c0_i32_0 = arith.constant 0 : i32
    return %c0_i32, %arg0 : i32, i32
  }
}

module attributes {stable_mosaic.version = 11 : i64} {
  func.func @_decoder_kernel(%arg0: i32, %arg1: memref<12x32xbf16, #tpu.memory_space<vmem>>, %arg2: memref<32x32xbf16, #tpu.memory_space<vmem>>, %arg3: memref<1x32xf32, #tpu.memory_space<vmem>>, %arg4: memref<32x32xbf16, #tpu.memory_space<vmem>>, %arg5: memref<1x32xf32, #tpu.memory_space<vmem>>, %arg6: memref<1x32xf32, #tpu.memory_space<vmem>>, %arg7: memref<1x1xf32, #tpu.memory_space<vmem>>, %arg8: memref<1x12xf32, #tpu.memory_space<vmem>>) attributes {dimension_semantics = [#tpu.dimension_semantics<parallel>], iteration_bounds = array<i64: 1>, scalar_prefetch = 0 : i64, scratch_operands = 0 : i64, tpu.core_type = #tpu.core_type<tc>, window_params = [{transform_indices = @transform_0, window_bounds = array<i64: 12, 32>}, {pipeline_mode = #tpu.pipeline_mode<synchronous>, transform_indices = @transform_1, window_bounds = array<i64: 32, 32>}, {pipeline_mode = #tpu.pipeline_mode<synchronous>, transform_indices = @transform_2, window_bounds = array<i64: 1, 32>}, {pipeline_mode = #tpu.pipeline_mode<synchronous>, transform_indices = @transform_3, window_bounds = array<i64: 32, 32>}, {pipeline_mode = #tpu.pipeline_mode<synchronous>, transform_indices = @transform_4, window_bounds = array<i64: 1, 32>}, {pipeline_mode = #tpu.pipeline_mode<synchronous>, transform_indices = @transform_5, window_bounds = array<i64: 1, 32>}, {pipeline_mode = #tpu.pipeline_mode<synchronous>, transform_indices = @transform_6, window_bounds = array<i64: 1, 1>}, {transform_indices = @transform_7, window_bounds = array<i64: 1, 12>}]} {
    %c0 = arith.constant 0 : index
    %c0_0 = arith.constant 0 : index
    %0 = vector.load %arg1[%c0, %c0_0] : memref<12x32xbf16, #tpu.memory_space<vmem>>, vector<12x32xbf16>
    %c0_1 = arith.constant 0 : index
    %c0_2 = arith.constant 0 : index
    %1 = vector.load %arg2[%c0_1, %c0_2] : memref<32x32xbf16, #tpu.memory_space<vmem>>, vector<32x32xbf16>
    %cst = arith.constant dense<0.000000e+00> : vector<12x32xf32>
    %2 = tpu.matmul %0, %1, %cst {dimension_numbers = #tpu.dot_dimension_numbers<[1], [0], [0], [1], [0, 0, 1, 1], [], []>} : vector<12x32xbf16>, vector<32x32xbf16>, vector<12x32xf32> -> vector<12x32xf32>
    %c0_3 = arith.constant 0 : index
    %c0_4 = arith.constant 0 : index
    %3 = vector.load %arg3[%c0_3, %c0_4] : memref<1x32xf32, #tpu.memory_space<vmem>>, vector<1x32xf32>
    %4 = vector.broadcast %3 : vector<1x32xf32> to vector<12x32xf32>
    %5 = arith.addf %2, %4 : vector<12x32xf32>
    %cst_5 = arith.constant 0.000000e+00 : f32
    %6 = vector.broadcast %cst_5 : f32 to vector<12x32xf32>
    %7 = arith.maximumf %5, %6 : vector<12x32xf32>
    %8 = arith.truncf %7 : vector<12x32xf32> to vector<12x32xbf16>
    %c0_6 = arith.constant 0 : index
    %c0_7 = arith.constant 0 : index
    %9 = vector.load %arg4[%c0_6, %c0_7] : memref<32x32xbf16, #tpu.memory_space<vmem>>, vector<32x32xbf16>
    %cst_8 = arith.constant dense<0.000000e+00> : vector<12x32xf32>
    %10 = tpu.matmul %8, %9, %cst_8 {dimension_numbers = #tpu.dot_dimension_numbers<[1], [0], [0], [1], [0, 0, 1, 1], [], []>} : vector<12x32xbf16>, vector<32x32xbf16>, vector<12x32xf32> -> vector<12x32xf32>
    %c0_9 = arith.constant 0 : index
    %c0_10 = arith.constant 0 : index
    %11 = vector.load %arg5[%c0_9, %c0_10] : memref<1x32xf32, #tpu.memory_space<vmem>>, vector<1x32xf32>
    %12 = vector.broadcast %11 : vector<1x32xf32> to vector<12x32xf32>
    %13 = arith.addf %10, %12 : vector<12x32xf32>
    %cst_11 = arith.constant 0.000000e+00 : f32
    %14 = vector.broadcast %cst_11 : f32 to vector<12x32xf32>
    %15 = arith.maximumf %13, %14 : vector<12x32xf32>
    %c0_12 = arith.constant 0 : index
    %c0_13 = arith.constant 0 : index
    %16 = vector.load %arg6[%c0_12, %c0_13] : memref<1x32xf32, #tpu.memory_space<vmem>>, vector<1x32xf32>
    %cst_14 = arith.constant dense<0.000000e+00> : vector<1x12xf32>
    %17 = tpu.matmul %16, %15, %cst_14 {dimension_numbers = #tpu.dot_dimension_numbers<[1], [1], [0], [0], [0, 0, 1, 0], [], []>} : vector<1x32xf32>, vector<12x32xf32>, vector<1x12xf32> -> vector<1x12xf32>
    %c0_15 = arith.constant 0 : index
    %c0_16 = arith.constant 0 : index
    %18 = vector.load %arg7[%c0_15, %c0_16] : memref<1x1xf32, #tpu.memory_space<vmem>>, vector<1x1xf32>
    %19 = vector.broadcast %18 : vector<1x1xf32> to vector<1x12xf32>
    %20 = arith.addf %17, %19 : vector<1x12xf32>
    %21 = arith.negf %20 : vector<1x12xf32>
    %22 = math.exp %21 : vector<1x12xf32>
    %cst_17 = arith.constant 1.000000e+00 : f32
    %23 = vector.broadcast %cst_17 : f32 to vector<1x12xf32>
    %24 = arith.addf %23, %22 : vector<1x12xf32>
    %25 = arith.divf %23, %24 : vector<1x12xf32>
    %c0_18 = arith.constant 0 : index
    %c0_19 = arith.constant 0 : index
    %26 = vector.load %arg8[%c0_18, %c0_19] : memref<1x12xf32, #tpu.memory_space<vmem>>, vector<1x12xf32>
    tpu.vector_store %arg8[%c0_18, %c0_19], %25 {strides = array<i32>} : memref<1x12xf32, #tpu.memory_space<vmem>>, vector<1x12xf32>,
    return
  }
  func.func @transform_0(%arg0: i32) -> (i32, i32) {
    %c0_i32 = arith.constant 0 : i32
    %c0_i32_0 = arith.constant 0 : i32
    return %arg0, %c0_i32 : i32, i32
  }
  func.func @transform_1(%arg0: i32) -> (i32, i32) {
    %c0_i32 = arith.constant 0 : i32
    %c0_i32_0 = arith.constant 0 : i32
    %c0_i32_1 = arith.constant 0 : i32
    return %c0_i32, %c0_i32_0 : i32, i32
  }
  func.func @transform_2(%arg0: i32) -> (i32, i32) {
    %c0_i32 = arith.constant 0 : i32
    %c0_i32_0 = arith.constant 0 : i32
    %c0_i32_1 = arith.constant 0 : i32
    return %c0_i32, %c0_i32_0 : i32, i32
  }
  func.func @transform_3(%arg0: i32) -> (i32, i32) {
    %c0_i32 = arith.constant 0 : i32
    %c0_i32_0 = arith.constant 0 : i32
    %c0_i32_1 = arith.constant 0 : i32
    return %c0_i32, %c0_i32_0 : i32, i32
  }
  func.func @transform_4(%arg0: i32) -> (i32, i32) {
    %c0_i32 = arith.constant 0 : i32
    %c0_i32_0 = arith.constant 0 : i32
    %c0_i32_1 = arith.constant 0 : i32
    return %c0_i32, %c0_i32_0 : i32, i32
  }
  func.func @transform_5(%arg0: i32) -> (i32, i32) {
    %c0_i32 = arith.constant 0 : i32
    %c0_i32_0 = arith.constant 0 : i32
    %c0_i32_1 = arith.constant 0 : i32
    return %c0_i32, %c0_i32_0 : i32, i32
  }
  func.func @transform_6(%arg0: i32) -> (i32, i32) {
    %c0_i32 = arith.constant 0 : i32
    %c0_i32_0 = arith.constant 0 : i32
    %c0_i32_1 = arith.constant 0 : i32
    return %c0_i32, %c0_i32_0 : i32, i32
  }
  func.func @transform_7(%arg0: i32) -> (i32, i32) {
    %c0_i32 = arith.constant 0 : i32
    %c0_i32_0 = arith.constant 0 : i32
    return %c0_i32, %arg0 : i32, i32
  }
}

</mosaic_0001>

<llo_original>
// kernel: tpu_custom_call.1
$region0: #{tpu_custom_call.1}
  #allocation0 [shape = 'u32[]', space=smem, size = 0x4, offset = 0x4, fixed_abs, tag = 'smem constant byte address 0x4 - core index']
  #allocation1 [shape = 'u32[144,128]{1,0:T(1,128)}', space=vmem, size = 0x12000, scoped, tag = 'internal scratch']
  #allocation2 [shape = 'f32[1,1]{1,0:T(1,128)S(1)}', space=vmem, size = 0x200, scoped, tag = 'scoped memory for tpu_custom_call.1']
  %s0 = inlined_call_operand.hbm [shape: bf16[12,32], index: 0, kind: input, shape index: {}]
  %s1 = inlined_call_operand.hbm [shape: bf16[32,32], index: 1, kind: input, shape index: {}]
  %s2 = inlined_call_operand.vmem [shape: f32[1,32], index: 2, kind: input, shape index: {}]
  %s3 = inlined_call_operand.hbm [shape: bf16[32,32], index: 3, kind: input, shape index: {}]
  %s4 = inlined_call_operand.vmem [shape: f32[1,32], index: 4, kind: input, shape index: {}]
  %s5 = inlined_call_operand.vmem [shape: f32[1,32], index: 5, kind: input, shape index: {}]
  %s6 = inlined_call_operand.<no memory space> [shape: f32[1,1], index: 6, kind: input, shape index: {}]
  %s7 = inlined_call_operand.hbm [shape: f32[1,12], index: 7, kind: output, shape index: {}]
  %s8 = sld [smem:[#allocation0]]
  $region50: #{tpu_custom_call.1} parent=0
    _
  %s10 = ssub.s32 1, %s8
  %s11 = scalar_select 0, %s10, %s8
  %v12 = vstv %s6
  %13 = vst [vmem:[#allocation2] sm:$0x1] %v12
  $region1: #{tpu_custom_call.1} parent=0
    #allocation3 [shape = 'u8[4096]{0}', space=vmem, size = 0x1000, scoped, tag = 'input window, operand 0, single buffered']
    #allocation4 [shape = 's32[1]{0}', space=sflag, size = 0x4, scoped, tag = 'scoped memory for tpu_custom_call.1']
    #allocation5 [shape = 's32[1]{0}', space=sflag, size = 0x4, scoped, tag = 'scoped memory for tpu_custom_call.1']
    #allocation6 [shape = 'u8[8192]{0}', space=vmem, size = 0x2000, scoped, tag = 'input window, operand 1, single buffered']
    #allocation7 [shape = 's32[1]{0}', space=sflag, size = 0x4, scoped, tag = 'scoped memory for tpu_custom_call.1']
    #allocation8 [shape = 'u8[8192]{0}', space=vmem, size = 0x2000, scoped, tag = 'input window, operand 3, single buffered']
    #allocation9 [shape = 'u8[512]{0}', space=vmem, size = 0x400, scoped, tag = 'output window, operand 0, single buffered']
    %14 = vsyncpa [#allocation4], 0
    %15 = vsyncpa [#allocation7], 0
    %16 = vsyncpa [#allocation5], 0
    // Predicated region
    $region2: #{tpu_custom_call.1} parent=1 // pred_check
      _
    $region3: #{tpu_custom_call.1} parent=1 // pred_check_branch
      %18 = sbr.rel (0) target = $region5
    $region4: #{tpu_custom_call.1} parent=1 // pred_region
      %s20 = ssub.s32 128, 128
      %21 = vsyncadd [#allocation4], %s20
      %s22 = sshll.u32 [#allocation3], 4
      %s23 = int_to_ptr.vmem [resolvable:$true] %s22
      %28 = dma.hbm_to_vmem [thread:$0]  %s0, 128, %s23, [#allocation4], 64, 64, 4
    $region5: #{tpu_custom_call.1} parent=1 // pred_fallthru
      _
    // Predicated region
    $region6: #{tpu_custom_call.1} parent=1 // pred_check
      _
    $region7: #{tpu_custom_call.1} parent=1 // pred_check_branch
      %30 = sbr.rel (0) target = $region9
    $region8: #{tpu_custom_call.1} parent=1 // pred_region
      %s32 = ssub.s32 256, 256
      %33 = vsyncadd [#allocation7], %s32
      %s34 = sshll.u32 [#allocation6], 4
      %s35 = int_to_ptr.vmem [resolvable:$true] %s34
      %40 = dma.hbm_to_vmem [thread:$0]  %s1, 256, %s35, [#allocation7], 64, 64, 4
    $region9: #{tpu_custom_call.1} parent=1 // pred_fallthru
      _
    // Predicated region
    $region10: #{tpu_custom_call.1} parent=1 // pred_check
      _
    $region11: #{tpu_custom_call.1} parent=1 // pred_check_branch
      %42 = sbr.rel (0) target = $region13
    $region12: #{tpu_custom_call.1} parent=1 // pred_region
      _
    $region13: #{tpu_custom_call.1} parent=1 // pred_fallthru
      _
    // Predicated region
    $region14: #{tpu_custom_call.1} parent=1 // pred_check
      _
    $region15: #{tpu_custom_call.1} parent=1 // pred_check_branch
      %44 = sbr.rel (0) target = $region17
    $region16: #{tpu_custom_call.1} parent=1 // pred_region
      %s46 = ssub.s32 256, 256
      %47 = vsyncadd [#allocation7], %s46
      %s48 = sshll.u32 [#allocation8], 4
      %s49 = int_to_ptr.vmem [resolvable:$true] %s48
      %54 = dma.hbm_to_vmem [thread:$0]  %s3, 256, %s49, [#allocation7], 64, 64, 4
    $region17: #{tpu_custom_call.1} parent=1 // pred_fallthru
      _
    // Predicated region
    $region18: #{tpu_custom_call.1} parent=1 // pred_check
      _
    $region19: #{tpu_custom_call.1} parent=1 // pred_check_branch
      %56 = sbr.rel (0) target = $region21
    $region20: #{tpu_custom_call.1} parent=1 // pred_region
      _
    $region21: #{tpu_custom_call.1} parent=1 // pred_fallthru
      _
    // Predicated region
    $region22: #{tpu_custom_call.1} parent=1 // pred_check
      _
    $region23: #{tpu_custom_call.1} parent=1 // pred_check_branch
      %58 = sbr.rel (0) target = $region25
    $region24: #{tpu_custom_call.1} parent=1 // pred_region
      _
    $region25: #{tpu_custom_call.1} parent=1 // pred_fallthru
      _
    // Predicated region
    $region26: #{tpu_custom_call.1} parent=1 // pred_check
      _
    $region27: #{tpu_custom_call.1} parent=1 // pred_check_branch
      %60 = sbr.rel (0) target = $region29
    $region28: #{tpu_custom_call.1} parent=1 // pred_region
      _
    $region29: #{tpu_custom_call.1} parent=1 // pred_fallthru
      _
    // Predicated region
    $region30: #{tpu_custom_call.1} parent=1 // pred_check
      _
    $region31: #{tpu_custom_call.1} parent=1 // pred_check_branch
      %62 = sbr.rel (0) target = $region33
    $region32: #{tpu_custom_call.1} parent=1 // pred_region
      %63 = dma.done [#allocation4], 128
    $region33: #{tpu_custom_call.1} parent=1 // pred_fallthru
      _
    // Predicated region
    $region34: #{tpu_custom_call.1} parent=1 // pred_check
      _
    $region35: #{tpu_custom_call.1} parent=1 // pred_check_branch
      %65 = sbr.rel (0) target = $region37
    $region36: #{tpu_custom_call.1} parent=1 // pred_region
      %66 = dma.done [#allocation7], 256
    $region37: #{tpu_custom_call.1} parent=1 // pred_fallthru
      _
    // Predicated region
    $region38: #{tpu_custom_call.1} parent=1 // pred_check
      _
    $region39: #{tpu_custom_call.1} parent=1 // pred_check_branch
      %68 = sbr.rel (0) target = $region41
    $region40: #{tpu_custom_call.1} parent=1 // pred_region
      %69 = dma.done [#allocation7], 256
    $region41: #{tpu_custom_call.1} parent=1 // pred_fallthru
      _
    %v71 = vld [vmem:[#allocation3] sm:$0xf]
    %v72 = vld [vmem:[#allocation3 + $0x4] sm:$0x3]
    %v73 = vld [vmem:[#allocation6] sm:$0xf]
    %v74 = vld [vmem:[#allocation6 + $0x4] sm:$0xf]
    %v75 = vld [vmem:[#allocation6 + $0x8] sm:$0xf]
    %v76 = vld [vmem:[#allocation6 + $0xc] sm:$0xf]
    %v77 = vld [vmem:[%s2] sm:$0x1]
    %v79 = vlaneseq
    %v80 = vshrl.u32 %v79, 7
    %v81 = vsub.s32 0, %v80
    %v82 = vrot.slane %v77, %v81
    %v86 = vunpack.c.l.b16 %v71
    %v87 = vunpack.c.l.b16 %v72
    %v88 = vpack.c.b16 %v87, %v86
    %v93 = vunpack.c.l.b16 %v73
    %v94 = vunpack.c.l.b16 %v74
    %v95 = vunpack.c.l.b16 %v75
    %v96 = vunpack.c.l.b16 %v76
    %v97 = vpack.c.b16 %v94, %v93
    %v98 = vpack.c.b16 %v96, %v95
    %vm101 = vcmask 261120
    %v103 = vsel %vm101, %v88, 0
    %105 = vmatprep.subr.bf16.mxu0 0
    %106 = vmatpush1.bf16.msra.mxu0 0
    %107 = vmatprep.subr.bf16.mxu0 0
    %108 = vmatpush1.bf16.msra.mxu0 0
    %109 = vmatprep.subr.bf16.mxu0 0
    %110 = vmatpush1.bf16.msra.mxu0 0
    %111 = vmatprep.subr.bf16.mxu0 0
    %112 = vmatpush1.bf16.msra.mxu0 0
    %113 = vmatprep.subr.bf16.mxu0 0
    %114 = vmatpush1.bf16.msra.mxu0 0
    %115 = vmatprep.subr.bf16.mxu0 0
    %116 = vmatpush1.bf16.msra.mxu0 0
    %117 = vmatprep.subr.bf16.mxu0 0
    %118 = vmatpush1.bf16.msra.mxu0 %v98
    %119 = vmatprep.subr.bf16.mxu0 0
    %120 = vmatpush1.bf16.msra.mxu0 %v97
    %121 = vmatprep.subr.bf16.mxu0 0
    %122 = vmatpush2.bf16.msra.mxu0 0
    %123 = vmatprep.subr.bf16.mxu0 0
    %124 = vmatpush2.bf16.msra.mxu0 0
    %125 = vmatprep.subr.bf16.mxu0 0
    %126 = vmatpush2.bf16.msra.mxu0 0
    %127 = vmatprep.subr.bf16.mxu0 0
    %128 = vmatpush2.bf16.msra.mxu0 0
    %129 = vmatprep.subr.bf16.mxu0 0
    %130 = vmatpush2.bf16.msra.mxu0 0
    %131 = vmatprep.subr.bf16.mxu0 0
    %132 = vmatpush2.bf16.msra.mxu0 0
    %133 = vmatprep.subr.bf16.mxu0 0
    %134 = vmatpush2.bf16.msra.mxu0 0
    %135 = vmatprep.subr.bf16.mxu0 0
    %136 = vmatpush2.bf16.msra.mxu0 0
    %137 = vmatprep.mubr.bf16.mxu0 0
    %138 = vmatmul.mubr.bf16.gmra.mxu0 %v103
    %v139 = vpop.f32.mrf.mxu0
    %v140 = vadd.f32 %v82, %v139
    %v141 = vpop.f32.mrf.mxu0
    %v142 = vpop.f32.mrf.mxu0
    %v143 = vadd.f32 %v82, %v142
    %v144 = vpop.f32.mrf.mxu0
    %145 = vdwg.mxu0
    %v146 = vmax.f32 %v140, 0.0
    %v147 = vmax.f32 %v143, 0.0
    %v148 = vpack.c.bf16 %v147, %v146
    %v149 = vld [vmem:[#allocation8] sm:$0xf]
    %v150 = vld [vmem:[#allocation8 + $0x4] sm:$0xf]
    %v151 = vld [vmem:[#allocation8 + $0x8] sm:$0xf]
    %v152 = vld [vmem:[#allocation8 + $0xc] sm:$0xf]
    %v153 = vld [vmem:[%s4] sm:$0x1]
    %v155 = vlaneseq
    %v156 = vshrl.u32 %v155, 7
    %v157 = vsub.s32 0, %v156
    %v158 = vrot.slane %v153, %v157
    %v164 = vunpack.c.l.b16 %v149
    %v165 = vunpack.c.l.b16 %v150
    %v166 = vunpack.c.l.b16 %v151
    %v167 = vunpack.c.l.b16 %v152
    %v168 = vpack.c.b16 %v165, %v164
    %v169 = vpack.c.b16 %v167, %v166
    %v173 = vsel %vm101, %v148, 0
    %175 = vmatprep.subr.bf16.mxu0 0
    %176 = vmatpush1.bf16.msra.mxu0 0
    %177 = vmatprep.subr.bf16.mxu0 0
    %178 = vmatpush1.bf16.msra.mxu0 0
    %179 = vmatprep.subr.bf16.mxu0 0
    %180 = vmatpush1.bf16.msra.mxu0 0
    %181 = vmatprep.subr.bf16.mxu0 0
    %182 = vmatpush1.bf16.msra.mxu0 0
    %183 = vmatprep.subr.bf16.mxu0 0
    %184 = vmatpush1.bf16.msra.mxu0 0
    %185 = vmatprep.subr.bf16.mxu0 0
    %186 = vmatpush1.bf16.msra.mxu0 0
    %187 = vmatprep.subr.bf16.mxu0 0
    %188 = vmatpush1.bf16.msra.mxu0 %v169
    %189 = vmatprep.subr.bf16.mxu0 0
    %190 = vmatpush1.bf16.msra.mxu0 %v168
    %191 = vmatprep.subr.bf16.mxu0 0
    %192 = vmatpush2.bf16.msra.mxu0 0
    %193 = vmatprep.subr.bf16.mxu0 0
    %194 = vmatpush2.bf16.msra.mxu0 0
    %195 = vmatprep.subr.bf16.mxu0 0
    %196 = vmatpush2.bf16.msra.mxu0 0
    %197 = vmatprep.subr.bf16.mxu0 0
    %198 = vmatpush2.bf16.msra.mxu0 0
    %199 = vmatprep.subr.bf16.mxu0 0
    %200 = vmatpush2.bf16.msra.mxu0 0
    %201 = vmatprep.subr.bf16.mxu0 0
    %202 = vmatpush2.bf16.msra.mxu0 0
    %203 = vmatprep.subr.bf16.mxu0 0
    %204 = vmatpush2.bf16.msra.mxu0 0
    %205 = vmatprep.subr.bf16.mxu0 0
    %206 = vmatpush2.bf16.msra.mxu0 0
    %207 = vmatprep.mubr.bf16.mxu0 0
    %208 = vmatmul.mubr.bf16.gmra.mxu0 %v173
    %v209 = vpop.f32.mrf.mxu0
    %v210 = vadd.f32 %v158, %v209
    %v211 = vpop.f32.mrf.mxu0
    %v212 = vpop.f32.mrf.mxu0
    %v213 = vadd.f32 %v158, %v212
    %v214 = vpop.f32.mrf.mxu0
    %215 = vdwg.mxu0
    %v216 = vmax.f32 %v210, 0.0
    %v217 = vmax.f32 %v213, 0.0
    %v218 = vld [vmem:[%s5] sm:$0x1]
    %v219 = vld [vmem:[#allocation2] sm:$0x1]
    %221 = vset.pattern.permute.xlu0 0
    %222 = vperm.xlu0 %221, %v219
    %v223 = vpop.permute.xlu0 %222
    %v225 = vlaneseq
    %v226 = vshrl.u32 %v225, 7
    %v227 = vsub.s32 0, %v226
    %v228 = vrot.slane %v223, %v227
    %v230 = vsel %vm101, %v218, 0
    %v233 = vsel %vm101, %v216, 0
    %v236 = vsel %vm101, %v217, 0
    %238 = vmatprep.subr.mxu0 0.0
    %239 = vmatpush1.xpose.msra.mxu0 0.0
    %240 = vmatprep.subr.mxu0 0.0
    %241 = vmatpush1.xpose.msra.mxu0 0.0
    %242 = vmatprep.subr.mxu0 0.0
    %243 = vmatpush1.xpose.msra.mxu0 0.0
    %244 = vmatprep.subr.mxu0 0.0
    %245 = vmatpush1.xpose.msra.mxu0 0.0
    %246 = vmatprep.subr.mxu0 0.0
    %247 = vmatpush1.xpose.msra.mxu0 0.0
    %248 = vmatprep.subr.mxu0 0.0
    %249 = vmatpush1.xpose.msra.mxu0 0.0
    %250 = vmatprep.subr.mxu0 0.0
    %251 = vmatpush1.xpose.msra.mxu0 0.0
    %252 = vmatprep.subr.mxu0 0.0
    %253 = vmatpush1.xpose.msra.mxu0 0.0
    %254 = vmatprep.subr.mxu0 0.0
    %255 = vmatpush1.xpose.msra.mxu0 0.0
    %256 = vmatprep.subr.mxu0 0.0
    %257 = vmatpush1.xpose.msra.mxu0 0.0
    %258 = vmatprep.subr.mxu0 0.0
    %259 = vmatpush1.xpose.msra.mxu0 0.0
    %260 = vmatprep.subr.mxu0 0.0
    %261 = vmatpush1.xpose.msra.mxu0 0.0
    %262 = vmatprep.subr.mxu0 0.0
    %263 = vmatpush1.xpose.msra.mxu0 0.0
    %264 = vmatprep.subr.mxu0 0.0
    %265 = vmatpush1.xpose.msra.mxu0 0.0
    %266 = vmatprep.subr.mxu0 0.0
    %267 = vmatpush1.xpose.msra.mxu0 %v236
    %268 = vmatprep.subr.mxu0 0.0
    %269 = vmatpush1.xpose.msra.mxu0 %v233
    %270 = vmatprep.subr.mxu0 0.0
    %271 = vmatpush2.xpose.msra.mxu0 0.0
    %272 = vmatprep.subr.mxu0 0.0
    %273 = vmatpush2.xpose.msra.mxu0 0.0
    %274 = vmatprep.subr.mxu0 0.0
    %275 = vmatpush2.xpose.msra.mxu0 0.0
    %276 = vmatprep.subr.mxu0 0.0
    %277 = vmatpush2.xpose.msra.mxu0 0.0
    %278 = vmatprep.subr.mxu0 0.0
    %279 = vmatpush2.xpose.msra.mxu0 0.0
    %280 = vmatprep.subr.mxu0 0.0
    %281 = vmatpush2.xpose.msra.mxu0 0.0
    %282 = vmatprep.subr.mxu0 0.0
    %283 = vmatpush2.xpose.msra.mxu0 0.0
    %284 = vmatprep.subr.mxu0 0.0
    %285 = vmatpush2.xpose.msra.mxu0 0.0
    %286 = vmatprep.subr.mxu0 0.0
    %287 = vmatpush2.xpose.msra.mxu0 0.0
    %288 = vmatprep.subr.mxu0 0.0
    %289 = vmatpush2.xpose.msra.mxu0 0.0
    %290 = vmatprep.subr.mxu0 0.0
    %291 = vmatpush2.xpose.msra.mxu0 0.0
    %292 = vmatprep.subr.mxu0 0.0
    %293 = vmatpush2.xpose.msra.mxu0 0.0
    %294 = vmatprep.subr.mxu0 0.0
    %295 = vmatpush2.xpose.msra.mxu0 0.0
    %296 = vmatprep.subr.mxu0 0.0
    %297 = vmatpush2.xpose.msra.mxu0 0.0
    %298 = vmatprep.subr.mxu0 0.0
    %299 = vmatpush2.xpose.msra.mxu0 0.0
    %300 = vmatprep.subr.mxu0 0.0
    %301 = vmatpush2.xpose.msra.mxu0 0.0
    %302 = vmatprep.mubr.f32.mxu0 0.0
    %303 = vmatmul.mubr.f32.gmra.mxu0 %v230
    %v304 = vpop.f32.mrf.mxu0
    %v305 = vadd.f32 %v228, %v304
    %v306 = vpop.f32.mrf.mxu0
    %307 = vdwg.mxu0
    %v308 = vxor.u32 %v305, 2147483648
    %v309 = vmul.f32 %v308, 1.442695
    %v310 = vpow.pop %v309
    %v311 = vadd.f32 %v310, 1.0
    %v312 = vrcp.pop %v311
    %v313 = vmul.f32 1.0, %v312
    %vm314 = vcmask 90112
    %315 = vst.msk [vmem:[#allocation9] sm:$0x1] %vm314, %v313
    // Predicated region
    $region42: #{tpu_custom_call.1} parent=1 // pred_check
      _
    $region43: #{tpu_custom_call.1} parent=1 // pred_check_branch
      %317 = sbr.rel (0) target = $region45
    $region44: #{tpu_custom_call.1} parent=1 // pred_region
      %s319 = ssub.s32 16, 16
      %320 = vsyncadd [#allocation5], %s319
      %s322 = sshll.u32 [#allocation9], 4
      %s323 = int_to_ptr.vmem [resolvable:$true] %s322
      %325 = dma.vmem_to_hbm [thread:$0]  %s323, 16, %s7, [#allocation5]
    $region45: #{tpu_custom_call.1} parent=1 // pred_fallthru
      _
    // Predicated region
    $region46: #{tpu_custom_call.1} parent=1 // pred_check
      _
    $region47: #{tpu_custom_call.1} parent=1 // pred_check_branch
      %327 = sbr.rel (0) target = $region49
    $region48: #{tpu_custom_call.1} parent=1 // pred_region
      %328 = dma.done [#allocation5], 16
    $region49: #{tpu_custom_call.1} parent=1 // pred_fallthru
      _
    %329 = vsyncpa [#allocation4], 1
    %330 = vsyncpa [#allocation7], 1
    %331 = vsyncpa [#allocation5], 1

// kernel: tpu_custom_call.1
$region0: #{tpu_custom_call.1}
  #allocation0 [shape = 'u32[]', space=smem, size = 0x4, offset = 0x4, fixed_abs, tag = 'smem constant byte address 0x4 - core index']
  #allocation1 [shape = 'u32[144,128]{1,0:T(1,128)}', space=vmem, size = 0x12000, scoped, tag = 'internal scratch']
  #allocation2 [shape = 'f32[1,1]{1,0:T(1,128)S(1)}', space=vmem, size = 0x200, scoped, tag = 'scoped memory for tpu_custom_call.1']
  %s0 = inlined_call_operand.hbm [shape: bf16[12,32], index: 0, kind: input, shape index: {}]
  %s1 = inlined_call_operand.hbm [shape: bf16[32,32], index: 1, kind: input, shape index: {}]
  %s2 = inlined_call_operand.vmem [shape: f32[1,32], index: 2, kind: input, shape index: {}]
  %s3 = inlined_call_operand.hbm [shape: bf16[32,32], index: 3, kind: input, shape index: {}]
  %s4 = inlined_call_operand.vmem [shape: f32[1,32], index: 4, kind: input, shape index: {}]
  %s5 = inlined_call_operand.vmem [shape: f32[1,32], index: 5, kind: input, shape index: {}]
  %s6 = inlined_call_operand.<no memory space> [shape: f32[1,1], index: 6, kind: input, shape index: {}]
  %s7 = inlined_call_operand.hbm [shape: f32[1,12], index: 7, kind: output, shape index: {}]
  %s8 = sld [smem:[#allocation0]]
  $region50: #{tpu_custom_call.1} parent=0
    _
  %s10 = ssub.s32 1, %s8
  %s11 = scalar_select 0, %s10, %s8
  %v12 = vstv %s6
  %13 = vst [vmem:[#allocation2] sm:$0x1] %v12
  $region1: #{tpu_custom_call.1} parent=0
    #allocation3 [shape = 'u8[4096]{0}', space=vmem, size = 0x1000, scoped, tag = 'input window, operand 0, single buffered']
    #allocation4 [shape = 's32[1]{0}', space=sflag, size = 0x4, scoped, tag = 'scoped memory for tpu_custom_call.1']
    #allocation5 [shape = 's32[1]{0}', space=sflag, size = 0x4, scoped, tag = 'scoped memory for tpu_custom_call.1']
    #allocation6 [shape = 'u8[8192]{0}', space=vmem, size = 0x2000, scoped, tag = 'input window, operand 1, single buffered']
    #allocation7 [shape = 's32[1]{0}', space=sflag, size = 0x4, scoped, tag = 'scoped memory for tpu_custom_call.1']
    #allocation8 [shape = 'u8[8192]{0}', space=vmem, size = 0x2000, scoped, tag = 'input window, operand 3, single buffered']
    #allocation9 [shape = 'u8[512]{0}', space=vmem, size = 0x400, scoped, tag = 'output window, operand 0, single buffered']
    %14 = vsyncpa [#allocation4], 0
    %15 = vsyncpa [#allocation7], 0
    %16 = vsyncpa [#allocation5], 0
    // Predicated region
    $region2: #{tpu_custom_call.1} parent=1 // pred_check
      _
    $region3: #{tpu_custom_call.1} parent=1 // pred_check_branch
      %18 = sbr.rel (0) target = $region5
    $region4: #{tpu_custom_call.1} parent=1 // pred_region
      %s20 = ssub.s32 128, 128
      %21 = vsyncadd [#allocation4], %s20
      %s22 = sshll.u32 [#allocation3], 4
      %s23 = int_to_ptr.vmem [resolvable:$true] %s22
      %28 = dma.hbm_to_vmem [thread:$0]  %s0, 128, %s23, [#allocation4], 64, 64, 4
    $region5: #{tpu_custom_call.1} parent=1 // pred_fallthru
      _
    // Predicated region
    $region6: #{tpu_custom_call.1} parent=1 // pred_check
      _
    $region7: #{tpu_custom_call.1} parent=1 // pred_check_branch
      %30 = sbr.rel (0) target = $region9
    $region8: #{tpu_custom_call.1} parent=1 // pred_region
      %s32 = ssub.s32 256, 256
      %33 = vsyncadd [#allocation7], %s32
      %s34 = sshll.u32 [#allocation6], 4
      %s35 = int_to_ptr.vmem [resolvable:$true] %s34
      %40 = dma.hbm_to_vmem [thread:$0]  %s1, 256, %s35, [#allocation7], 64, 64, 4
    $region9: #{tpu_custom_call.1} parent=1 // pred_fallthru
      _
    // Predicated region
    $region10: #{tpu_custom_call.1} parent=1 // pred_check
      _
    $region11: #{tpu_custom_call.1} parent=1 // pred_check_branch
      %42 = sbr.rel (0) target = $region13
    $region12: #{tpu_custom_call.1} parent=1 // pred_region
      _
    $region13: #{tpu_custom_call.1} parent=1 // pred_fallthru
      _
    // Predicated region
    $region14: #{tpu_custom_call.1} parent=1 // pred_check
      _
    $region15: #{tpu_custom_call.1} parent=1 // pred_check_branch
      %44 = sbr.rel (0) target = $region17
    $region16: #{tpu_custom_call.1} parent=1 // pred_region
      %s46 = ssub.s32 256, 256
      %47 = vsyncadd [#allocation7], %s46
      %s48 = sshll.u32 [#allocation8], 4
      %s49 = int_to_ptr.vmem [resolvable:$true] %s48
      %54 = dma.hbm_to_vmem [thread:$0]  %s3, 256, %s49, [#allocation7], 64, 64, 4
    $region17: #{tpu_custom_call.1} parent=1 // pred_fallthru
      _
    // Predicated region
    $region18: #{tpu_custom_call.1} parent=1 // pred_check
      _
    $region19: #{tpu_custom_call.1} parent=1 // pred_check_branch
      %56 = sbr.rel (0) target = $region21
    $region20: #{tpu_custom_call.1} parent=1 // pred_region
      _
    $region21: #{tpu_custom_call.1} parent=1 // pred_fallthru
      _
    // Predicated region
    $region22: #{tpu_custom_call.1} parent=1 // pred_check
      _
    $region23: #{tpu_custom_call.1} parent=1 // pred_check_branch
      %58 = sbr.rel (0) target = $region25
    $region24: #{tpu_custom_call.1} parent=1 // pred_region
      _
    $region25: #{tpu_custom_call.1} parent=1 // pred_fallthru
      _
    // Predicated region
    $region26: #{tpu_custom_call.1} parent=1 // pred_check
      _
    $region27: #{tpu_custom_call.1} parent=1 // pred_check_branch
      %60 = sbr.rel (0) target = $region29
    $region28: #{tpu_custom_call.1} parent=1 // pred_region
      _
    $region29: #{tpu_custom_call.1} parent=1 // pred_fallthru
      _
    // Predicated region
    $region30: #{tpu_custom_call.1} parent=1 // pred_check
      _
    $region31: #{tpu_custom_call.1} parent=1 // pred_check_branch
      %62 = sbr.rel (0) target = $region33
    $region32: #{tpu_custom_call.1} parent=1 // pred_region
      %63 = dma.done [#allocation4], 128
    $region33: #{tpu_custom_call.1} parent=1 // pred_fallthru
      _
    // Predicated region
    $region34: #{tpu_custom_call.1} parent=1 // pred_check
      _
    $region35: #{tpu_custom_call.1} parent=1 // pred_check_branch
      %65 = sbr.rel (0) target = $region37
    $region36: #{tpu_custom_call.1} parent=1 // pred_region
      %66 = dma.done [#allocation7], 256
    $region37: #{tpu_custom_call.1} parent=1 // pred_fallthru
      _
    // Predicated region
    $region38: #{tpu_custom_call.1} parent=1 // pred_check
      _
    $region39: #{tpu_custom_call.1} parent=1 // pred_check_branch
      %68 = sbr.rel (0) target = $region41
    $region40: #{tpu_custom_call.1} parent=1 // pred_region
      %69 = dma.done [#allocation7], 256
    $region41: #{tpu_custom_call.1} parent=1 // pred_fallthru
      _
    %v71 = vld [vmem:[#allocation3] sm:$0xf]
    %v72 = vld [vmem:[#allocation3 + $0x4] sm:$0x3]
    %v73 = vld [vmem:[#allocation6] sm:$0xf]
    %v74 = vld [vmem:[#allocation6 + $0x4] sm:$0xf]
    %v75 = vld [vmem:[#allocation6 + $0x8] sm:$0xf]
    %v76 = vld [vmem:[#allocation6 + $0xc] sm:$0xf]
    %v77 = vld [vmem:[%s2] sm:$0x1]
    %v79 = vlaneseq
    %v80 = vshrl.u32 %v79, 7
    %v81 = vsub.s32 0, %v80
    %v82 = vrot.slane %v77, %v81
    %v86 = vunpack.c.l.b16 %v71
    %v87 = vunpack.c.l.b16 %v72
    %v88 = vpack.c.b16 %v87, %v86
    %v93 = vunpack.c.l.b16 %v73
    %v94 = vunpack.c.l.b16 %v74
    %v95 = vunpack.c.l.b16 %v75
    %v96 = vunpack.c.l.b16 %v76
    %v97 = vpack.c.b16 %v94, %v93
    %v98 = vpack.c.b16 %v96, %v95
    %vm101 = vcmask 261120
    %v103 = vsel %vm101, %v88, 0
    %105 = vmatprep.subr.bf16.mxu0 0
    %106 = vmatpush1.bf16.msra.mxu0 0
    %107 = vmatprep.subr.bf16.mxu0 0
    %108 = vmatpush1.bf16.msra.mxu0 0
    %109 = vmatprep.subr.bf16.mxu0 0
    %110 = vmatpush1.bf16.msra.mxu0 0
    %111 = vmatprep.subr.bf16.mxu0 0
    %112 = vmatpush1.bf16.msra.mxu0 0
    %113 = vmatprep.subr.bf16.mxu0 0
    %114 = vmatpush1.bf16.msra.mxu0 0
    %115 = vmatprep.subr.bf16.mxu0 0
    %116 = vmatpush1.bf16.msra.mxu0 0
    %117 = vmatprep.subr.bf16.mxu0 0
    %118 = vmatpush1.bf16.msra.mxu0 %v98
    %119 = vmatprep.subr.bf16.mxu0 0
    %120 = vmatpush1.bf16.msra.mxu0 %v97
    %121 = vmatprep.subr.bf16.mxu0 0
    %122 = vmatpush2.bf16.msra.mxu0 0
    %123 = vmatprep.subr.bf16.mxu0 0
    %124 = vmatpush2.bf16.msra.mxu0 0
    %125 = vmatprep.subr.bf16.mxu0 0
    %126 = vmatpush2.bf16.msra.mxu0 0
    %127 = vmatprep.subr.bf16.mxu0 0
    %128 = vmatpush2.bf16.msra.mxu0 0
    %129 = vmatprep.subr.bf16.mxu0 0
    %130 = vmatpush2.bf16.msra.mxu0 0
    %131 = vmatprep.subr.bf16.mxu0 0
    %132 = vmatpush2.bf16.msra.mxu0 0
    %133 = vmatprep.subr.bf16.mxu0 0
    %134 = vmatpush2.bf16.msra.mxu0 0
    %135 = vmatprep.subr.bf16.mxu0 0
    %136 = vmatpush2.bf16.msra.mxu0 0
    %137 = vmatprep.mubr.bf16.mxu0 0
    %138 = vmatmul.mubr.bf16.gmra.mxu0 %v103
    %v139 = vpop.f32.mrf.mxu0
    %v140 = vadd.f32 %v82, %v139
    %v141 = vpop.f32.mrf.mxu0
    %v142 = vpop.f32.mrf.mxu0
    %v143 = vadd.f32 %v82, %v142
    %v144 = vpop.f32.mrf.mxu0
    %145 = vdwg.mxu0
    %v146 = vmax.f32 %v140, 0.0
    %v147 = vmax.f32 %v143, 0.0
    %v148 = vpack.c.bf16 %v147, %v146
    %v149 = vld [vmem:[#allocation8] sm:$0xf]
    %v150 = vld [vmem:[#allocation8 + $0x4] sm:$0xf]
    %v151 = vld [vmem:[#allocation8 + $0x8] sm:$0xf]
    %v152 = vld [vmem:[#allocation8 + $0xc] sm:$0xf]
    %v153 = vld [vmem:[%s4] sm:$0x1]
    %v155 = vlaneseq
    %v156 = vshrl.u32 %v155, 7
    %v157 = vsub.s32 0, %v156
    %v158 = vrot.slane %v153, %v157
    %v164 = vunpack.c.l.b16 %v149
    %v165 = vunpack.c.l.b16 %v150
    %v166 = vunpack.c.l.b16 %v151
    %v167 = vunpack.c.l.b16 %v152
    %v168 = vpack.c.b16 %v165, %v164
    %v169 = vpack.c.b16 %v167, %v166
    %v173 = vsel %vm101, %v148, 0
    %175 = vmatprep.subr.bf16.mxu0 0
    %176 = vmatpush1.bf16.msra.mxu0 0
    %177 = vmatprep.subr.bf16.mxu0 0
    %178 = vmatpush1.bf16.msra.mxu0 0
    %179 = vmatprep.subr.bf16.mxu0 0
    %180 = vmatpush1.bf16.msra.mxu0 0
    %181 = vmatprep.subr.bf16.mxu0 0
    %182 = vmatpush1.bf16.msra.mxu0 0
    %183 = vmatprep.subr.bf16.mxu0 0
    %184 = vmatpush1.bf16.msra.mxu0 0
    %185 = vmatprep.subr.bf16.mxu0 0
    %186 = vmatpush1.bf16.msra.mxu0 0
    %187 = vmatprep.subr.bf16.mxu0 0
    %188 = vmatpush1.bf16.msra.mxu0 %v169
    %189 = vmatprep.subr.bf16.mxu0 0
    %190 = vmatpush1.bf16.msra.mxu0 %v168
    %191 = vmatprep.subr.bf16.mxu0 0
    %192 = vmatpush2.bf16.msra.mxu0 0
    %193 = vmatprep.subr.bf16.mxu0 0
    %194 = vmatpush2.bf16.msra.mxu0 0
    %195 = vmatprep.subr.bf16.mxu0 0
    %196 = vmatpush2.bf16.msra.mxu0 0
    %197 = vmatprep.subr.bf16.mxu0 0
    %198 = vmatpush2.bf16.msra.mxu0 0
    %199 = vmatprep.subr.bf16.mxu0 0
    %200 = vmatpush2.bf16.msra.mxu0 0
    %201 = vmatprep.subr.bf16.mxu0 0
    %202 = vmatpush2.bf16.msra.mxu0 0
    %203 = vmatprep.subr.bf16.mxu0 0
    %204 = vmatpush2.bf16.msra.mxu0 0
    %205 = vmatprep.subr.bf16.mxu0 0
    %206 = vmatpush2.bf16.msra.mxu0 0
    %207 = vmatprep.mubr.bf16.mxu0 0
    %208 = vmatmul.mubr.bf16.gmra.mxu0 %v173
    %v209 = vpop.f32.mrf.mxu0
    %v210 = vadd.f32 %v158, %v209
    %v211 = vpop.f32.mrf.mxu0
    %v212 = vpop.f32.mrf.mxu0
    %v213 = vadd.f32 %v158, %v212
    %v214 = vpop.f32.mrf.mxu0
    %215 = vdwg.mxu0
    %v216 = vmax.f32 %v210, 0.0
    %v217 = vmax.f32 %v213, 0.0
    %v218 = vld [vmem:[%s5] sm:$0x1]
    %v219 = vld [vmem:[#allocation2] sm:$0x1]
    %221 = vset.pattern.permute.xlu0 0
    %222 = vperm.xlu0 %221, %v219
    %v223 = vpop.permute.xlu0 %222
    %v225 = vlaneseq
    %v226 = vshrl.u32 %v225, 7
    %v227 = vsub.s32 0, %v226
    %v228 = vrot.slane %v223, %v227
    %v230 = vsel %vm101, %v218, 0
    %v233 = vsel %vm101, %v216, 0
    %v236 = vsel %vm101, %v217, 0
    %238 = vmatprep.subr.mxu0 0.0
    %239 = vmatpush1.xpose.msra.mxu0 0.0
    %240 = vmatprep.subr.mxu0 0.0
    %241 = vmatpush1.xpose.msra.mxu0 0.0
    %242 = vmatprep.subr.mxu0 0.0
    %243 = vmatpush1.xpose.msra.mxu0 0.0
    %244 = vmatprep.subr.mxu0 0.0
    %245 = vmatpush1.xpose.msra.mxu0 0.0
    %246 = vmatprep.subr.mxu0 0.0
    %247 = vmatpush1.xpose.msra.mxu0 0.0
    %248 = vmatprep.subr.mxu0 0.0
    %249 = vmatpush1.xpose.msra.mxu0 0.0
    %250 = vmatprep.subr.mxu0 0.0
    %251 = vmatpush1.xpose.msra.mxu0 0.0
    %252 = vmatprep.subr.mxu0 0.0
    %253 = vmatpush1.xpose.msra.mxu0 0.0
    %254 = vmatprep.subr.mxu0 0.0
    %255 = vmatpush1.xpose.msra.mxu0 0.0
    %256 = vmatprep.subr.mxu0 0.0
    %257 = vmatpush1.xpose.msra.mxu0 0.0
    %258 = vmatprep.subr.mxu0 0.0
    %259 = vmatpush1.xpose.msra.mxu0 0.0
    %260 = vmatprep.subr.mxu0 0.0
    %261 = vmatpush1.xpose.msra.mxu0 0.0
    %262 = vmatprep.subr.mxu0 0.0
    %263 = vmatpush1.xpose.msra.mxu0 0.0
    %264 = vmatprep.subr.mxu0 0.0
    %265 = vmatpush1.xpose.msra.mxu0 0.0
    %266 = vmatprep.subr.mxu0 0.0
    %267 = vmatpush1.xpose.msra.mxu0 %v236
    %268 = vmatprep.subr.mxu0 0.0
    %269 = vmatpush1.xpose.msra.mxu0 %v233
    %270 = vmatprep.subr.mxu0 0.0
    %271 = vmatpush2.xpose.msra.mxu0 0.0
    %272 = vmatprep.subr.mxu0 0.0
    %273 = vmatpush2.xpose.msra.mxu0 0.0
    %274 = vmatprep.subr.mxu0 0.0
    %275 = vmatpush2.xpose.msra.mxu0 0.0
    %276 = vmatprep.subr.mxu0 0.0
    %277 = vmatpush2.xpose.msra.mxu0 0.0
    %278 = vmatprep.subr.mxu0 0.0
    %279 = vmatpush2.xpose.msra.mxu0 0.0
    %280 = vmatprep.subr.mxu0 0.0
    %281 = vmatpush2.xpose.msra.mxu0 0.0
    %282 = vmatprep.subr.mxu0 0.0
    %283 = vmatpush2.xpose.msra.mxu0 0.0
    %284 = vmatprep.subr.mxu0 0.0
    %285 = vmatpush2.xpose.msra.mxu0 0.0
    %286 = vmatprep.subr.mxu0 0.0
    %287 = vmatpush2.xpose.msra.mxu0 0.0
    %288 = vmatprep.subr.mxu0 0.0
    %289 = vmatpush2.xpose.msra.mxu0 0.0
    %290 = vmatprep.subr.mxu0 0.0
    %291 = vmatpush2.xpose.msra.mxu0 0.0
    %292 = vmatprep.subr.mxu0 0.0
    %293 = vmatpush2.xpose.msra.mxu0 0.0
    %294 = vmatprep.subr.mxu0 0.0
    %295 = vmatpush2.xpose.msra.mxu0 0.0
    %296 = vmatprep.subr.mxu0 0.0
    %297 = vmatpush2.xpose.msra.mxu0 0.0
    %298 = vmatprep.subr.mxu0 0.0
    %299 = vmatpush2.xpose.msra.mxu0 0.0
    %300 = vmatprep.subr.mxu0 0.0
    %301 = vmatpush2.xpose.msra.mxu0 0.0
    %302 = vmatprep.mubr.f32.mxu0 0.0
    %303 = vmatmul.mubr.f32.gmra.mxu0 %v230
    %v304 = vpop.f32.mrf.mxu0
    %v305 = vadd.f32 %v228, %v304
    %v306 = vpop.f32.mrf.mxu0
    %307 = vdwg.mxu0
    %v308 = vxor.u32 %v305, 2147483648
    %v309 = vmul.f32 %v308, 1.442695
    %v310 = vpow.pop %v309
    %v311 = vadd.f32 %v310, 1.0
    %v312 = vrcp.pop %v311
    %v313 = vmul.f32 1.0, %v312
    %vm314 = vcmask 90112
    %315 = vst.msk [vmem:[#allocation9] sm:$0x1] %vm314, %v313
    // Predicated region
    $region42: #{tpu_custom_call.1} parent=1 // pred_check
      _
    $region43: #{tpu_custom_call.1} parent=1 // pred_check_branch
      %317 = sbr.rel (0) target = $region45
    $region44: #{tpu_custom_call.1} parent=1 // pred_region
      %s319 = ssub.s32 16, 16
      %320 = vsyncadd [#allocation5], %s319
      %s322 = sshll.u32 [#allocation9], 4
      %s323 = int_to_ptr.vmem [resolvable:$true] %s322
      %325 = dma.vmem_to_hbm [thread:$0]  %s323, 16, %s7, [#allocation5]
    $region45: #{tpu_custom_call.1} parent=1 // pred_fallthru
      _
    // Predicated region
    $region46: #{tpu_custom_call.1} parent=1 // pred_check
      _
    $region47: #{tpu_custom_call.1} parent=1 // pred_check_branch
      %327 = sbr.rel (0) target = $region49
    $region48: #{tpu_custom_call.1} parent=1 // pred_region
      %328 = dma.done [#allocation5], 16
    $region49: #{tpu_custom_call.1} parent=1 // pred_fallthru
      _
    %329 = vsyncpa [#allocation4], 1
    %330 = vsyncpa [#allocation7], 1
    %331 = vsyncpa [#allocation5], 1

</llo_original>
